<compile_context>
chip_gen: v7x
topology: tpu7x:2x2x1
jax: 0.10.0
libtpu: 0.0.40
codegen_flags: <defaults>
</compile_context>

<pallas_src>
import functools

import jax
import jax.numpy as jnp
from jax import lax
from jax.experimental import pallas as pl
from jax.experimental.pallas import tpu as pltpu

LN_EPS = 1e-5
LANE = 128


def _round_up(n, m):
    return ((n + m - 1) // m) * m


def _proj_kernel(x_ref, wf_ref, bf_ref, g_ref, beta_ref, w2_ref, b2_ref,
                 out_ref, hid_ref, *, hidden_true):
    x = x_ref[...]                                     # [TB, Ds_p]  bf16
    hp = hid_ref.shape[-1]                             # padded hidden (multiple of 128)

    # Fused lin1 + res1: one MXU dot, output is [TB, 2*hp] (lane-dense).
    fused = jnp.dot(x, wf_ref[...], preferred_element_type=jnp.float32) + bf_ref[...]
    h = fused[:, :hp]                                  # lin1 branch (pre-LN)
    res = fused[:, hp:]                                # residual branch

    # LayerNorm over the *true* hidden width (padded lanes are exactly 0).
    if hidden_true == hp:
        mean = jnp.mean(h, axis=-1, keepdims=True)
        centered = h - mean
        var = jnp.mean(centered * centered, axis=-1, keepdims=True)
    else:
        lane = lax.broadcasted_iota(jnp.int32, h.shape, 1)
        mask = (lane < hidden_true).astype(jnp.float32)
        inv_n = jnp.float32(1.0 / hidden_true)
        mean = jnp.sum(h * mask, axis=-1, keepdims=True) * inv_n
        centered = (h - mean) * mask
        var = jnp.sum(centered * centered, axis=-1, keepdims=True) * inv_n

    h_norm = centered * lax.rsqrt(var + LN_EPS) * g_ref[...] + beta_ref[...]

    # relu(LN(lin1(x)) + res1(x)); dropout is identity in eval mode.
    # TODO(synk): training-mode dropout (p=0.2) would need pltpu.prng_random_bits.
    hidden = jnp.maximum(h_norm + res, 0.0)
    hid_ref[...] = hidden

    # lin2: hidden @ W2 + b2  (bf16 operands, f32 accumulation)
    out_ref[...] = (jnp.dot(hidden.astype(w2_ref.dtype), w2_ref[...],
                            preferred_element_type=jnp.float32) + b2_ref[...])


def query_projection_forward(x, params, *, block_b=512, return_hidden=True):
    """x: [B, dim_sem] f32. params: dict of [in, out] weights / (1, out) biases."""
    B, dim_sem = x.shape
    hidden = params["w1"].shape[1]
    dim_graph = params["w2"].shape[1]

    ds_p = _round_up(dim_sem, LANE)
    h_p = _round_up(hidden, LANE)
    dg_p = _round_up(dim_graph, LANE)
    tb = min(block_b, _round_up(B, LANE))              # large batch tile, amortizes step overhead
    b_p = _round_up(B, tb)

    def pad2(a, r, c):
        return jnp.pad(a, ((0, r - a.shape[0]), (0, c - a.shape[1])))

    # Pad everything to lane-dense shapes; fuse W1|Wres and b1|bres.
    x_p = pad2(x, b_p, ds_p).astype(jnp.bfloat16)
    wf = jnp.concatenate([pad2(params["w1"], ds_p, h_p),
                          pad2(params["wres"], ds_p, h_p)], axis=1).astype(jnp.bfloat16)
    bf = jnp.concatenate([pad2(params["b1"], 1, h_p),
                          pad2(params["bres"], 1, h_p)], axis=1).astype(jnp.float32)
    g = pad2(params["gamma"], 1, h_p).astype(jnp.float32)
    beta = pad2(params["beta"], 1, h_p).astype(jnp.float32)
    w2 = pad2(params["w2"], h_p, dg_p).astype(jnp.bfloat16)
    b2 = pad2(params["b2"], 1, dg_p).astype(jnp.float32)

    kernel = functools.partial(_proj_kernel, hidden_true=hidden)
    grid = (b_p // tb,)

    out_p, hid_p = pl.pallas_call(
        kernel,
        out_shape=(jax.ShapeDtypeStruct((b_p, dg_p), jnp.float32),
                   jax.ShapeDtypeStruct((b_p, h_p), jnp.float32)),
        grid=grid,
        in_specs=[
            pl.BlockSpec((tb, ds_p), lambda i: (i, 0)),        # x: tiled over batch
            pl.BlockSpec((ds_p, 2 * h_p), lambda i: (0, 0)),   # fused W1|Wres (resident)
            pl.BlockSpec((1, 2 * h_p), lambda i: (0, 0)),      # fused b1|bres (resident)
            pl.BlockSpec((1, h_p), lambda i: (0, 0)),          # gamma
            pl.BlockSpec((1, h_p), lambda i: (0, 0)),          # beta
            pl.BlockSpec((h_p, dg_p), lambda i: (0, 0)),       # W2 (resident)
            pl.BlockSpec((1, dg_p), lambda i: (0, 0)),         # b2
        ],
        out_specs=(pl.BlockSpec((tb, dg_p), lambda i: (i, 0)),
                   pl.BlockSpec((tb, h_p), lambda i: (i, 0))),
        compiler_params=pltpu.CompilerParams(
            dimension_semantics=("parallel",)),                # megacore sharding on v7x
    )(x_p, wf, bf, g, beta, w2, b2)

    out = out_p[:B, :dim_graph]
    if return_hidden:
        return out, hid_p[:B, :hidden]
    return out


def init_params(key, dim_sem, dim_graph, hidden_dim):
    """Deterministic synthetic parameters; Linear weights stored as [in, out]."""
    ks = jax.random.split(key, 6)
    scale = 0.05
    return {
        "w1":    scale * jax.random.normal(ks[0], (dim_sem, hidden_dim), jnp.float32),
        "b1":    scale * jax.random.normal(ks[1], (1, hidden_dim), jnp.float32),
        "gamma": jnp.ones((1, hidden_dim), jnp.float32),
        "beta":  jnp.zeros((1, hidden_dim), jnp.float32),
        "wres":  scale * jax.random.normal(ks[2], (dim_sem, hidden_dim), jnp.float32),
        "bres":  scale * jax.random.normal(ks[3], (1, hidden_dim), jnp.float32),
        "w2":    scale * jax.random.normal(ks[4], (hidden_dim, dim_graph), jnp.float32),
        "b2":    scale * jax.random.normal(ks[5], (1, dim_graph), jnp.float32),
    }


def _reference(x, p):
    """Pure-JAX reference using the same bf16 matmul operands / f32 accumulation."""
    xb = x.astype(jnp.bfloat16)
    h = jnp.dot(xb, p["w1"].astype(jnp.bfloat16),
                preferred_element_type=jnp.float32) + p["b1"]
    mean = h.mean(-1, keepdims=True)
    var = ((h - mean) ** 2).mean(-1, keepdims=True)
    h = (h - mean) * lax.rsqrt(var + LN_EPS) * p["gamma"] + p["beta"]
    res = jnp.dot(xb, p["wres"].astype(jnp.bfloat16),
                  preferred_element_type=jnp.float32) + p["bres"]
    hidden = jnp.maximum(h + res, 0.0)
    out = jnp.dot(hidden.astype(jnp.bfloat16), p["w2"].astype(jnp.bfloat16),
                  preferred_element_type=jnp.float32) + p["b2"]
    return out, hidden


if __name__ == "__main__":
    # Small shapes consistent with the module (dim_sem != hidden_dim -> res1 is Linear).
    B, dim_sem, hidden_dim, dim_graph = 8, 32, 64, 16

    key = jax.random.PRNGKey(0)
    k_x, k_p = jax.random.split(key)
    x = jax.random.normal(k_x, (B, dim_sem), jnp.float32)
    params = init_params(k_p, dim_sem, dim_graph, hidden_dim)

    out, hidden = query_projection_forward(x, params)
    jax.block_until_ready((out, hidden))

    ref_out, ref_hid = _reference(x, params)
    assert out.shape == (B, dim_graph) and hidden.shape == (B, hidden_dim)
    assert jnp.allclose(out, ref_out, atol=1e-2, rtol=1e-2)
    assert jnp.allclose(hidden, ref_hid, atol=1e-2, rtol=1e-2)

    print("KERNEL_OK")
</pallas_src>

<mosaic_0001>
module attributes {stable_mosaic.version = 11 : i64} {
  func.func @_proj_kernel(%arg0: i32, %arg1: memref<128x128xbf16, #tpu.memory_space<vmem>>, %arg2: memref<128x256xbf16, #tpu.memory_space<vmem>>, %arg3: memref<1x256xf32, #tpu.memory_space<vmem>>, %arg4: memref<1x128xf32, #tpu.memory_space<vmem>>, %arg5: memref<1x128xf32, #tpu.memory_space<vmem>>, %arg6: memref<128x128xbf16, #tpu.memory_space<vmem>>, %arg7: memref<1x128xf32, #tpu.memory_space<vmem>>, %arg8: memref<128x128xf32, #tpu.memory_space<vmem>>, %arg9: memref<128x128xf32, #tpu.memory_space<vmem>>) attributes {dimension_semantics = [#tpu.dimension_semantics<parallel>], iteration_bounds = array<i64: 1>, scalar_prefetch = 0 : i64, scratch_operands = 0 : i64, tpu.core_type = #tpu.core_type<tc>, window_params = [{transform_indices = @transform_0, window_bounds = array<i64: 128, 128>}, {pipeline_mode = #tpu.pipeline_mode<synchronous>, transform_indices = @transform_1, window_bounds = array<i64: 128, 256>}, {pipeline_mode = #tpu.pipeline_mode<synchronous>, transform_indices = @transform_2, window_bounds = array<i64: 1, 256>}, {pipeline_mode = #tpu.pipeline_mode<synchronous>, transform_indices = @transform_3, window_bounds = array<i64: 1, 128>}, {pipeline_mode = #tpu.pipeline_mode<synchronous>, transform_indices = @transform_4, window_bounds = array<i64: 1, 128>}, {pipeline_mode = #tpu.pipeline_mode<synchronous>, transform_indices = @transform_5, window_bounds = array<i64: 128, 128>}, {pipeline_mode = #tpu.pipeline_mode<synchronous>, transform_indices = @transform_6, window_bounds = array<i64: 1, 128>}, {transform_indices = @transform_7, window_bounds = array<i64: 128, 128>}, {transform_indices = @transform_8, window_bounds = array<i64: 128, 128>}]} {
    %c0 = arith.constant 0 : index
    %c0_0 = arith.constant 0 : index
    %0 = vector.load %arg1[%c0, %c0_0] : memref<128x128xbf16, #tpu.memory_space<vmem>>, vector<128x128xbf16>
    %c0_1 = arith.constant 0 : index
    %c0_2 = arith.constant 0 : index
    %1 = vector.load %arg2[%c0_1, %c0_2] : memref<128x256xbf16, #tpu.memory_space<vmem>>, vector<128x256xbf16>
    %cst = arith.constant dense<0.000000e+00> : vector<128x256xf32>
    %2 = tpu.matmul %0, %1, %cst {dimension_numbers = #tpu.dot_dimension_numbers<[1], [0], [0], [1], [0, 0, 1, 1], [], []>} : vector<128x128xbf16>, vector<128x256xbf16>, vector<128x256xf32> -> vector<128x256xf32>
    %c0_3 = arith.constant 0 : index
    %c0_4 = arith.constant 0 : index
    %3 = vector.load %arg3[%c0_3, %c0_4] : memref<1x256xf32, #tpu.memory_space<vmem>>, vector<1x256xf32>
    %4 = vector.broadcast %3 : vector<1x256xf32> to vector<128x256xf32>
    %5 = arith.addf %2, %4 : vector<128x256xf32>
    %6 = vector.extract_strided_slice %5 {offsets = [0, 0], sizes = [128, 128], strides = [1, 1]} : vector<128x256xf32> to vector<128x128xf32>
    %7 = vector.extract_strided_slice %5 {offsets = [0, 128], sizes = [128, 128], strides = [1, 1]} : vector<128x256xf32> to vector<128x128xf32>
    %8 = tpu.iota {dimensions = array<i32: 1>} : vector<128x128xi32>
    %c64_i32 = arith.constant 64 : i32
    %9 = vector.broadcast %c64_i32 : i32 to vector<128x128xi32>
    %10 = arith.cmpi slt, %8, %9 : vector<128x128xi32>
    %11 = arith.extui %10 : vector<128x128xi1> to vector<128x128xi32>
    %12 = arith.sitofp %11 : vector<128x128xi32> to vector<128x128xf32>
    %13 = arith.mulf %6, %12 : vector<128x128xf32>
    %cst_5 = arith.constant dense<0.000000e+00> : vector<128xf32>
    %14 = vector.multi_reduction <add>, %13, %cst_5 [1] : vector<128x128xf32> to vector<128xf32>
    %15 = vector.shape_cast %14 : vector<128xf32> to vector<128x1xf32>
    %cst_6 = arith.constant 1.562500e-02 : f32
    %16 = vector.broadcast %cst_6 : f32 to vector<128x1xf32>
    %17 = arith.mulf %15, %16 : vector<128x1xf32>
    %18 = vector.broadcast %17 : vector<128x1xf32> to vector<128x128xf32>
    %19 = arith.subf %6, %18 : vector<128x128xf32>
    %20 = arith.mulf %19, %12 : vector<128x128xf32>
    %21 = arith.mulf %20, %20 : vector<128x128xf32>
    %cst_7 = arith.constant dense<0.000000e+00> : vector<128xf32>
    %22 = vector.multi_reduction <add>, %21, %cst_7 [1] : vector<128x128xf32> to vector<128xf32>
    %23 = vector.shape_cast %22 : vector<128xf32> to vector<128x1xf32>
    %cst_8 = arith.constant 1.562500e-02 : f32
    %24 = vector.broadcast %cst_8 : f32 to vector<128x1xf32>
    %25 = arith.mulf %23, %24 : vector<128x1xf32>
    %cst_9 = arith.constant 9.99999974E-6 : f32
    %26 = vector.broadcast %cst_9 : f32 to vector<128x1xf32>
    %27 = arith.addf %25, %26 : vector<128x1xf32>
    %28 = math.rsqrt %27 : vector<128x1xf32>
    %29 = vector.broadcast %28 : vector<128x1xf32> to vector<128x128xf32>
    %30 = arith.mulf %20, %29 : vector<128x128xf32>
    %c0_10 = arith.constant 0 : index
    %c0_11 = arith.constant 0 : index
    %31 = vector.load %arg4[%c0_10, %c0_11] : memref<1x128xf32, #tpu.memory_space<vmem>>, vector<1x128xf32>
    %32 = vector.broadcast %31 : vector<1x128xf32> to vector<128x128xf32>
    %33 = arith.mulf %30, %32 : vector<128x128xf32>
    %c0_12 = arith.constant 0 : index
    %c0_13 = arith.constant 0 : index
    %34 = vector.load %arg5[%c0_12, %c0_13] : memref<1x128xf32, #tpu.memory_space<vmem>>, vector<1x128xf32>
    %35 = vector.broadcast %34 : vector<1x128xf32> to vector<128x128xf32>
    %36 = arith.addf %33, %35 : vector<128x128xf32>
    %37 = arith.addf %36, %7 : vector<128x128xf32>
    %cst_14 = arith.constant 0.000000e+00 : f32
    %38 = vector.broadcast %cst_14 : f32 to vector<128x128xf32>
    %39 = arith.maximumf %37, %38 : vector<128x128xf32>
    %c0_15 = arith.constant 0 : index
    %c0_16 = arith.constant 0 : index
    %40 = vector.load %arg9[%c0_15, %c0_16] : memref<128x128xf32, #tpu.memory_space<vmem>>, vector<128x128xf32>
    tpu.vector_store %arg9[%c0_15, %c0_16], %39 {strides = array<i32>} : memref<128x128xf32, #tpu.memory_space<vmem>>, vector<128x128xf32>,
    %41 = arith.truncf %39 : vector<128x128xf32> to vector<128x128xbf16>
    %c0_17 = arith.constant 0 : index
    %c0_18 = arith.constant 0 : index
    %42 = vector.load %arg6[%c0_17, %c0_18] : memref<128x128xbf16, #tpu.memory_space<vmem>>, vector<128x128xbf16>
    %cst_19 = arith.constant dense<0.000000e+00> : vector<128x128xf32>
    %43 = tpu.matmul %41, %42, %cst_19 {dimension_numbers = #tpu.dot_dimension_numbers<[1], [0], [0], [1], [0, 0, 1, 1], [], []>} : vector<128x128xbf16>, vector<128x128xbf16>, vector<128x128xf32> -> vector<128x128xf32>
    %c0_20 = arith.constant 0 : index
    %c0_21 = arith.constant 0 : index
    %44 = vector.load %arg7[%c0_20, %c0_21] : memref<1x128xf32, #tpu.memory_space<vmem>>, vector<1x128xf32>
    %45 = vector.broadcast %44 : vector<1x128xf32> to vector<128x128xf32>
    %46 = arith.addf %43, %45 : vector<128x128xf32>
    %c0_22 = arith.constant 0 : index
    %c0_23 = arith.constant 0 : index
    %47 = vector.load %arg8[%c0_22, %c0_23] : memref<128x128xf32, #tpu.memory_space<vmem>>, vector<128x128xf32>
    tpu.vector_store %arg8[%c0_22, %c0_23], %46 {strides = array<i32>} : memref<128x128xf32, #tpu.memory_space<vmem>>, vector<128x128xf32>,
    return
  }
  func.func @transform_0(%arg0: i32) -> (i32, i32) {
    %c0_i32 = arith.constant 0 : i32
    %c0_i32_0 = arith.constant 0 : i32
    return %arg0, %c0_i32 : i32, i32
  }
  func.func @transform_1(%arg0: i32) -> (i32, i32) {
    %c0_i32 = arith.constant 0 : i32
    %c0_i32_0 = arith.constant 0 : i32
    %c0_i32_1 = arith.constant 0 : i32
    return %c0_i32, %c0_i32_0 : i32, i32
  }
  func.func @transform_2(%arg0: i32) -> (i32, i32) {
    %c0_i32 = arith.constant 0 : i32
    %c0_i32_0 = arith.constant 0 : i32
    %c0_i32_1 = arith.constant 0 : i32
    return %c0_i32, %c0_i32_0 : i32, i32
  }
  func.func @transform_3(%arg0: i32) -> (i32, i32) {
    %c0_i32 = arith.constant 0 : i32
    %c0_i32_0 = arith.constant 0 : i32
    %c0_i32_1 = arith.constant 0 : i32
    return %c0_i32, %c0_i32_0 : i32, i32
  }
  func.func @transform_4(%arg0: i32) -> (i32, i32) {
    %c0_i32 = arith.constant 0 : i32
    %c0_i32_0 = arith.constant 0 : i32
    %c0_i32_1 = arith.constant 0 : i32
    return %c0_i32, %c0_i32_0 : i32, i32
  }
  func.func @transform_5(%arg0: i32) -> (i32, i32) {
    %c0_i32 = arith.constant 0 : i32
    %c0_i32_0 = arith.constant 0 : i32
    %c0_i32_1 = arith.constant 0 : i32
    return %c0_i32, %c0_i32_0 : i32, i32
  }
  func.func @transform_6(%arg0: i32) -> (i32, i32) {
    %c0_i32 = arith.constant 0 : i32
    %c0_i32_0 = arith.constant 0 : i32
    %c0_i32_1 = arith.constant 0 : i32
    return %c0_i32, %c0_i32_0 : i32, i32
  }
  func.func @transform_7(%arg0: i32) -> (i32, i32) {
    %c0_i32 = arith.constant 0 : i32
    %c0_i32_0 = arith.constant 0 : i32
    return %arg0, %c0_i32 : i32, i32
  }
  func.func @transform_8(%arg0: i32) -> (i32, i32) {
    %c0_i32 = arith.constant 0 : i32
    %c0_i32_0 = arith.constant 0 : i32
    return %arg0, %c0_i32 : i32, i32
  }
}

</mosaic_0001>

<llo_original>
// kernel: tpu_custom_call.1
$region0: #{tpu_custom_call.1}
  #allocation0 [shape = 'u32[]', space=smem, size = 0x4, offset = 0x4, fixed_abs, tag = 'smem constant byte address 0x4 - core index']
  #allocation1 [shape = 'u32[144,128]{1,0:T(1,128)}', space=vmem, size = 0x12000, scoped, tag = 'internal scratch']
  %s0 = inlined_call_operand.hbm [shape: bf16[128,128], index: 0, kind: input, shape index: {}]
  %s1 = inlined_call_operand.hbm [shape: bf16[128,256], index: 1, kind: input, shape index: {}]
  %s2 = inlined_call_operand.vmem [shape: f32[1,256], index: 2, kind: input, shape index: {}]
  %s3 = inlined_call_operand.vmem [shape: f32[1,128], index: 3, kind: input, shape index: {}]
  %s4 = inlined_call_operand.vmem [shape: f32[1,128], index: 4, kind: input, shape index: {}]
  %s5 = inlined_call_operand.hbm [shape: bf16[128,128], index: 5, kind: input, shape index: {}]
  %s6 = inlined_call_operand.vmem [shape: f32[1,128], index: 6, kind: input, shape index: {}]
  %s7 = inlined_call_operand.hbm [shape: f32[128,128], index: 7, kind: output, shape index: {0}]
  %s8 = inlined_call_operand.hbm [shape: f32[128,128], index: 8, kind: output, shape index: {1}]
  %9 = xla_tuple %s7, %s8
  %s10 = sld [smem:[#allocation0]]
  $region58: #{tpu_custom_call.1} parent=0
    _
  %s12 = ssub.s32 1, %s10
  %s13 = scalar_select 0, %s12, %s10
  $region1: #{tpu_custom_call.1} parent=0
    #allocation2 [shape = 'u8[32768]{0}', space=vmem, size = 0x8000, scoped, tag = 'input window, operand 0, single buffered']
    #allocation3 [shape = 's32[1]{0}', space=sflag, size = 0x4, scoped, tag = 'scoped memory for tpu_custom_call.1']
    #allocation4 [shape = 's32[1]{0}', space=sflag, size = 0x4, scoped, tag = 'scoped memory for tpu_custom_call.1']
    #allocation5 [shape = 'u8[65536]{0}', space=vmem, size = 0x10000, scoped, tag = 'input window, operand 1, single buffered']
    #allocation6 [shape = 's32[1]{0}', space=sflag, size = 0x4, scoped, tag = 'scoped memory for tpu_custom_call.1']
    #allocation7 [shape = 'u8[32768]{0}', space=vmem, size = 0x8000, scoped, tag = 'input window, operand 5, single buffered']
    #allocation8 [shape = 'u8[65536]{0}', space=vmem, size = 0x10000, scoped, tag = 'output window, operand 0, single buffered']
    #allocation9 [shape = 'u8[65536]{0}', space=vmem, size = 0x10000, scoped, tag = 'output window, operand 1, single buffered']
    #allocation10 [shape = 's32[1]{0}', space=sflag, size = 0x4, scoped, tag = 'scoped memory for tpu_custom_call.1']
    %14 = vsyncpa [#allocation3], 0
    %15 = vsyncpa [#allocation6], 0
    %16 = vsyncpa [#allocation4], 0
    %17 = vsyncpa [#allocation10], 0
    // Predicated region
    $region2: #{tpu_custom_call.1} parent=1 // pred_check
      _
    $region3: #{tpu_custom_call.1} parent=1 // pred_check_branch
      %19 = sbr.rel (0) target = $region5
    $region4: #{tpu_custom_call.1} parent=1 // pred_region
      %s21 = ssub.s32 1024, 1024
      %22 = vsyncadd [#allocation3], %s21
      %s23 = sshll.u32 [#allocation2], 4
      %s24 = int_to_ptr.vmem [resolvable:$true] %s23
      %29 = dma.hbm_to_vmem [thread:$0]  %s0, 1024, %s24, [#allocation3], 64, 64, 4
    $region5: #{tpu_custom_call.1} parent=1 // pred_fallthru
      _
    // Predicated region
    $region6: #{tpu_custom_call.1} parent=1 // pred_check
      _
    $region7: #{tpu_custom_call.1} parent=1 // pred_check_branch
      %31 = sbr.rel (0) target = $region9
    $region8: #{tpu_custom_call.1} parent=1 // pred_region
      %s33 = ssub.s32 2048, 2048
      %34 = vsyncadd [#allocation6], %s33
      %s35 = sshll.u32 [#allocation5], 4
      %s36 = int_to_ptr.vmem [resolvable:$true] %s35
      %41 = dma.hbm_to_vmem [thread:$0]  %s1, 2048, %s36, [#allocation6], 128, 128, 8
    $region9: #{tpu_custom_call.1} parent=1 // pred_fallthru
      _
    // Predicated region
    $region10: #{tpu_custom_call.1} parent=1 // pred_check
      _
    $region11: #{tpu_custom_call.1} parent=1 // pred_check_branch
      %43 = sbr.rel (0) target = $region13
    $region12: #{tpu_custom_call.1} parent=1 // pred_region
      _
    $region13: #{tpu_custom_call.1} parent=1 // pred_fallthru
      _
    // Predicated region
    $region14: #{tpu_custom_call.1} parent=1 // pred_check
      _
    $region15: #{tpu_custom_call.1} parent=1 // pred_check_branch
      %45 = sbr.rel (0) target = $region17
    $region16: #{tpu_custom_call.1} parent=1 // pred_region
      _
    $region17: #{tpu_custom_call.1} parent=1 // pred_fallthru
      _
    // Predicated region
    $region18: #{tpu_custom_call.1} parent=1 // pred_check
      _
    $region19: #{tpu_custom_call.1} parent=1 // pred_check_branch
      %47 = sbr.rel (0) target = $region21
    $region20: #{tpu_custom_call.1} parent=1 // pred_region
      _
    $region21: #{tpu_custom_call.1} parent=1 // pred_fallthru
      _
    // Predicated region
    $region22: #{tpu_custom_call.1} parent=1 // pred_check
      _
    $region23: #{tpu_custom_call.1} parent=1 // pred_check_branch
      %49 = sbr.rel (0) target = $region25
    $region24: #{tpu_custom_call.1} parent=1 // pred_region
      %s51 = ssub.s32 1024, 1024
      %52 = vsyncadd [#allocation6], %s51
      %s53 = sshll.u32 [#allocation7], 4
      %s54 = int_to_ptr.vmem [resolvable:$true] %s53
      %59 = dma.hbm_to_vmem [thread:$0]  %s5, 1024, %s54, [#allocation6], 64, 64, 4
    $region25: #{tpu_custom_call.1} parent=1 // pred_fallthru
      _
    // Predicated region
    $region26: #{tpu_custom_call.1} parent=1 // pred_check
      _
    $region27: #{tpu_custom_call.1} parent=1 // pred_check_branch
      %61 = sbr.rel (0) target = $region29
    $region28: #{tpu_custom_call.1} parent=1 // pred_region
      _
    $region29: #{tpu_custom_call.1} parent=1 // pred_fallthru
      _
    // Predicated region
    $region30: #{tpu_custom_call.1} parent=1 // pred_check
      _
    $region31: #{tpu_custom_call.1} parent=1 // pred_check_branch
      %63 = sbr.rel (0) target = $region33
    $region32: #{tpu_custom_call.1} parent=1 // pred_region
      %64 = dma.done [#allocation3], 1024
    $region33: #{tpu_custom_call.1} parent=1 // pred_fallthru
      _
    // Predicated region
    $region34: #{tpu_custom_call.1} parent=1 // pred_check
      _
    $region35: #{tpu_custom_call.1} parent=1 // pred_check_branch
      %66 = sbr.rel (0) target = $region37
    $region36: #{tpu_custom_call.1} parent=1 // pred_region
      %67 = dma.done [#allocation6], 2048
    $region37: #{tpu_custom_call.1} parent=1 // pred_fallthru
      _
    // Predicated region
    $region38: #{tpu_custom_call.1} parent=1 // pred_check
      _
    $region39: #{tpu_custom_call.1} parent=1 // pred_check_branch
      %69 = sbr.rel (0) target = $region41
    $region40: #{tpu_custom_call.1} parent=1 // pred_region
      %70 = dma.done [#allocation6], 1024
    $region41: #{tpu_custom_call.1} parent=1 // pred_fallthru
      _
    %v72 = vld [vmem:[#allocation2] sm:$0xf]
    %v73 = vld [vmem:[#allocation2 + $0x4] sm:$0xf]
    %v74 = vld [vmem:[#allocation2 + $0x8] sm:$0xf]
    %v75 = vld [vmem:[#allocation2 + $0xc] sm:$0xf]
    %v76 = vld [vmem:[#allocation2 + $0x10] sm:$0xf]
    %v77 = vld [vmem:[#allocation2 + $0x14] sm:$0xf]
    %v78 = vld [vmem:[#allocation2 + $0x18] sm:$0xf]
    %v79 = vld [vmem:[#allocation2 + $0x1c] sm:$0xf]
    %v80 = vld [vmem:[#allocation2 + $0x20] sm:$0xf]
    %v81 = vld [vmem:[#allocation2 + $0x24] sm:$0xf]
    %v82 = vld [vmem:[#allocation2 + $0x28] sm:$0xf]
    %v83 = vld [vmem:[#allocation2 + $0x2c] sm:$0xf]
    %v84 = vld [vmem:[#allocation2 + $0x30] sm:$0xf]
    %v85 = vld [vmem:[#allocation2 + $0x34] sm:$0xf]
    %v86 = vld [vmem:[#allocation2 + $0x38] sm:$0xf]
    %v87 = vld [vmem:[#allocation2 + $0x3c] sm:$0xf]
    %v88 = vld [vmem:[#allocation5] sm:$0xff]
    %v89 = vld [vmem:[#allocation5 + $0x8] sm:$0xff]
    %v90 = vld [vmem:[#allocation5 + $0x10] sm:$0xff]
    %v91 = vld [vmem:[#allocation5 + $0x18] sm:$0xff]
    %v92 = vld [vmem:[#allocation5 + $0x20] sm:$0xff]
    %v93 = vld [vmem:[#allocation5 + $0x28] sm:$0xff]
    %v94 = vld [vmem:[#allocation5 + $0x30] sm:$0xff]
    %v95 = vld [vmem:[#allocation5 + $0x38] sm:$0xff]
    %v96 = vld [vmem:[#allocation5 + $0x40] sm:$0xff]
    %v97 = vld [vmem:[#allocation5 + $0x48] sm:$0xff]
    %v98 = vld [vmem:[#allocation5 + $0x50] sm:$0xff]
    %v99 = vld [vmem:[#allocation5 + $0x58] sm:$0xff]
    %v100 = vld [vmem:[#allocation5 + $0x60] sm:$0xff]
    %v101 = vld [vmem:[#allocation5 + $0x68] sm:$0xff]
    %v102 = vld [vmem:[#allocation5 + $0x70] sm:$0xff]
    %v103 = vld [vmem:[#allocation5 + $0x78] sm:$0xff]
    %v104 = vld [vmem:[%s2] sm:$0x3]
    %v106 = vlaneseq
    %v107 = vshrl.u32 %v106, 7
    %v108 = vsub.s32 0, %v107
    %v109 = vrot.slane %v104, %v108
    %v110 = vlaneseq
    %v111 = vshrl.u32 %v110, 7
    %v112 = vsub.s32 1, %v111
    %v113 = vrot.slane %v104, %v112
    %v132 = vunpack.c.l.b16 %v72
    %v133 = vunpack.c.l.b16 %v73
    %v134 = vunpack.c.l.b16 %v74
    %v135 = vunpack.c.l.b16 %v75
    %v136 = vunpack.c.l.b16 %v76
    %v137 = vunpack.c.l.b16 %v77
    %v138 = vunpack.c.l.b16 %v78
    %v139 = vunpack.c.l.b16 %v79
    %v140 = vunpack.c.l.b16 %v80
    %v141 = vunpack.c.l.b16 %v81
    %v142 = vunpack.c.l.b16 %v82
    %v143 = vunpack.c.l.b16 %v83
    %v144 = vunpack.c.l.b16 %v84
    %v145 = vunpack.c.l.b16 %v85
    %v146 = vunpack.c.l.b16 %v86
    %v147 = vunpack.c.l.b16 %v87
    %v148 = vpack.c.b16 %v133, %v132
    %v149 = vpack.c.b16 %v135, %v134
    %v150 = vpack.c.b16 %v137, %v136
    %v151 = vpack.c.b16 %v139, %v138
    %v152 = vpack.c.b16 %v141, %v140
    %v153 = vpack.c.b16 %v143, %v142
    %v154 = vpack.c.b16 %v145, %v144
    %v155 = vpack.c.b16 %v147, %v146
    %v180 = vunpack.c.l.b16 %v88
    %v181 = vunpack.c.h.b16 %v88
    %v182 = vunpack.c.l.b16 %v89
    %v183 = vunpack.c.h.b16 %v89
    %v184 = vunpack.c.l.b16 %v90
    %v185 = vunpack.c.h.b16 %v90
    %v186 = vunpack.c.l.b16 %v91
    %v187 = vunpack.c.h.b16 %v91
    %v188 = vunpack.c.l.b16 %v92
    %v189 = vunpack.c.h.b16 %v92
    %v190 = vunpack.c.l.b16 %v93
    %v191 = vunpack.c.h.b16 %v93
    %v192 = vunpack.c.l.b16 %v94
    %v193 = vunpack.c.h.b16 %v94
    %v194 = vunpack.c.l.b16 %v95
    %v195 = vunpack.c.h.b16 %v95
    %v196 = vunpack.c.l.b16 %v96
    %v197 = vunpack.c.h.b16 %v96
    %v198 = vunpack.c.l.b16 %v97
    %v199 = vunpack.c.h.b16 %v97
    %v200 = vunpack.c.l.b16 %v98
    %v201 = vunpack.c.h.b16 %v98
    %v202 = vunpack.c.l.b16 %v99
    %v203 = vunpack.c.h.b16 %v99
    %v204 = vunpack.c.l.b16 %v100
    %v205 = vunpack.c.h.b16 %v100
    %v206 = vunpack.c.l.b16 %v101
    %v207 = vunpack.c.h.b16 %v101
    %v208 = vunpack.c.l.b16 %v102
    %v209 = vunpack.c.h.b16 %v102
    %v210 = vunpack.c.l.b16 %v103
    %v211 = vunpack.c.h.b16 %v103
    %v212 = vpack.c.b16 %v182, %v180
    %v213 = vpack.c.b16 %v183, %v181
    %v214 = vpack.c.b16 %v186, %v184
    %v215 = vpack.c.b16 %v187, %v185
    %v216 = vpack.c.b16 %v190, %v188
    %v217 = vpack.c.b16 %v191, %v189
    %v218 = vpack.c.b16 %v194, %v192
    %v219 = vpack.c.b16 %v195, %v193
    %v220 = vpack.c.b16 %v198, %v196
    %v221 = vpack.c.b16 %v199, %v197
    %v222 = vpack.c.b16 %v202, %v200
    %v223 = vpack.c.b16 %v203, %v201
    %v224 = vpack.c.b16 %v206, %v204
    %v225 = vpack.c.b16 %v207, %v205
    %v226 = vpack.c.b16 %v210, %v208
    %v227 = vpack.c.b16 %v211, %v209
    %244 = vmatprep.subr.bf16.mxu0 %v213
    %245 = vmatpush1.bf16.msra.mxu0 %v212
    %246 = vmatprep.subr.bf16.mxu0 %v215
    %247 = vmatpush1.bf16.msra.mxu0 %v214
    %248 = vmatprep.subr.bf16.mxu0 %v217
    %249 = vmatpush1.bf16.msra.mxu0 %v216
    %250 = vmatprep.subr.bf16.mxu0 %v219
    %251 = vmatpush1.bf16.msra.mxu0 %v218
    %252 = vmatprep.subr.bf16.mxu0 %v221
    %253 = vmatpush1.bf16.msra.mxu0 %v220
    %254 = vmatprep.subr.bf16.mxu0 %v223
    %255 = vmatpush1.bf16.msra.mxu0 %v222
    %256 = vmatprep.subr.bf16.mxu0 %v225
    %257 = vmatpush1.bf16.msra.mxu0 %v224
    %258 = vmatprep.subr.bf16.mxu0 %v227
    %259 = vmatpush1.bf16.msra.mxu0 %v226
    %260 = vmatprep.subr.bf16.mxu0 0
    %261 = vmatpush1.bf16.msra.mxu0 0
    %262 = vmatprep.subr.bf16.mxu0 0
    %263 = vmatpush1.bf16.msra.mxu0 0
    %264 = vmatprep.subr.bf16.mxu0 0
    %265 = vmatpush1.bf16.msra.mxu0 0
    %266 = vmatprep.subr.bf16.mxu0 0
    %267 = vmatpush1.bf16.msra.mxu0 0
    %268 = vmatprep.subr.bf16.mxu0 0
    %269 = vmatpush1.bf16.msra.mxu0 0
    %270 = vmatprep.subr.bf16.mxu0 0
    %271 = vmatpush1.bf16.msra.mxu0 0
    %272 = vmatprep.subr.bf16.mxu0 0
    %273 = vmatpush1.bf16.msra.mxu0 0
    %274 = vmatprep.subr.bf16.mxu0 0
    %275 = vmatpush1.bf16.msra.mxu0 0
    %276 = vmatprep.mubr.bf16.mxu0 0
    %277 = vmatmul.mubr.bf16.gmra.mrb[0].mxu0 %v148
    %v278 = vpop.f32.mrb[0].mxu0
    %v279 = vadd.f32 %v109, %v278
    %v280 = vpop.f32.mrb[0].mxu0
    %v281 = vadd.f32 %v113, %v280
    %v282 = vpop.f32.mrb[0].mxu0
    %v283 = vadd.f32 %v109, %v282
    %v284 = vpop.f32.mrb[0].mxu0
    %v285 = vadd.f32 %v113, %v284
    %286 = vmatprep.mubr.bf16.mxu0 0
    %287 = vmatmul.mubr.bf16.gmra.mrb[0].mxu0 %v149
    %v288 = vpop.f32.mrb[0].mxu0
    %v289 = vadd.f32 %v109, %v288
    %v290 = vpop.f32.mrb[0].mxu0
    %v291 = vadd.f32 %v113, %v290
    %v292 = vpop.f32.mrb[0].mxu0
    %v293 = vadd.f32 %v109, %v292
    %v294 = vpop.f32.mrb[0].mxu0
    %v295 = vadd.f32 %v113, %v294
    %296 = vmatprep.mubr.bf16.mxu0 0
    %297 = vmatmul.mubr.bf16.gmra.mrb[0].mxu0 %v150
    %v298 = vpop.f32.mrb[0].mxu0
    %v299 = vadd.f32 %v109, %v298
    %v300 = vpop.f32.mrb[0].mxu0
    %v301 = vadd.f32 %v113, %v300
    %v302 = vpop.f32.mrb[0].mxu0
    %v303 = vadd.f32 %v109, %v302
    %v304 = vpop.f32.mrb[0].mxu0
    %v305 = vadd.f32 %v113, %v304
    %306 = vmatprep.mubr.bf16.mxu0 0
    %307 = vmatmul.mubr.bf16.gmra.mrb[0].mxu0 %v151
    %v308 = vpop.f32.mrb[0].mxu0
    %v309 = vadd.f32 %v109, %v308
    %v310 = vpop.f32.mrb[0].mxu0
    %v311 = vadd.f32 %v113, %v310
    %v312 = vpop.f32.mrb[0].mxu0
    %v313 = vadd.f32 %v109, %v312
    %v314 = vpop.f32.mrb[0].mxu0
    %v315 = vadd.f32 %v113, %v314
    %316 = vmatprep.mubr.bf16.mxu0 0
    %317 = vmatmul.mubr.bf16.gmra.mrb[0].mxu0 %v152
    %v318 = vpop.f32.mrb[0].mxu0
    %v319 = vadd.f32 %v109, %v318
    %v320 = vpop.f32.mrb[0].mxu0
    %v321 = vadd.f32 %v113, %v320
    %v322 = vpop.f32.mrb[0].mxu0
    %v323 = vadd.f32 %v109, %v322
    %v324 = vpop.f32.mrb[0].mxu0
    %v325 = vadd.f32 %v113, %v324
    %326 = vmatprep.mubr.bf16.mxu0 0
    %327 = vmatmul.mubr.bf16.gmra.mrb[0].mxu0 %v153
    %v328 = vpop.f32.mrb[0].mxu0
    %v329 = vadd.f32 %v109, %v328
    %v330 = vpop.f32.mrb[0].mxu0
    %v331 = vadd.f32 %v113, %v330
    %v332 = vpop.f32.mrb[0].mxu0
    %v333 = vadd.f32 %v109, %v332
    %v334 = vpop.f32.mrb[0].mxu0
    %v335 = vadd.f32 %v113, %v334
    %336 = vmatprep.mubr.bf16.mxu0 0
    %337 = vmatmul.mubr.bf16.gmra.mrb[0].mxu0 %v154
    %v338 = vpop.f32.mrb[0].mxu0
    %v339 = vadd.f32 %v109, %v338
    %v340 = vpop.f32.mrb[0].mxu0
    %v341 = vadd.f32 %v113, %v340
    %v342 = vpop.f32.mrb[0].mxu0
    %v343 = vadd.f32 %v109, %v342
    %v344 = vpop.f32.mrb[0].mxu0
    %v345 = vadd.f32 %v113, %v344
    %346 = vmatprep.mubr.bf16.mxu0 0
    %347 = vmatmul.mubr.bf16.gmra.mrb[0].mxu0 %v155
    %v348 = vpop.f32.mrb[0].mxu0
    %v349 = vadd.f32 %v109, %v348
    %v350 = vpop.f32.mrb[0].mxu0
    %v351 = vadd.f32 %v113, %v350
    %v352 = vpop.f32.mrb[0].mxu0
    %v353 = vadd.f32 %v109, %v352
    %v354 = vpop.f32.mrb[0].mxu0
    %v355 = vadd.f32 %v113, %v354
    %356 = vdwg.mxu0
    %v357 = vlaneseq
    %v358 = vand.u32 %v357, 127
    %vm359 = vcmp.lt.s32.totalorder %v358, 64
    %v360 = vsel %vm359, 1, 0
    %v361 = vcvt.s32.f32 %v360
    %v362 = vmul.f32 %v279, %v361
    %v363 = vmul.f32 %v283, %v361
    %v364 = vmul.f32 %v289, %v361
    %v365 = vmul.f32 %v293, %v361
    %v366 = vmul.f32 %v299, %v361
    %v367 = vmul.f32 %v303, %v361
    %v368 = vmul.f32 %v309, %v361
    %v369 = vmul.f32 %v313, %v361
    %v370 = vmul.f32 %v319, %v361
    %v371 = vmul.f32 %v323, %v361
    %v372 = vmul.f32 %v329, %v361
    %v373 = vmul.f32 %v333, %v361
    %v374 = vmul.f32 %v339, %v361
    %v375 = vmul.f32 %v343, %v361
    %v376 = vmul.f32 %v349, %v361
    %v377 = vmul.f32 %v353, %v361
    %378 = vadd.xlane.f32.xlu0 %v362
    %v379 = vpop.xlane.xlu0 %378
    %380 = vadd.xlane.f32.xlu0 %v363
    %v381 = vpop.xlane.xlu0 %380
    %382 = vadd.xlane.f32.xlu0 %v364
    %v383 = vpop.xlane.xlu0 %382
    %384 = vadd.xlane.f32.xlu0 %v365
    %v385 = vpop.xlane.xlu0 %384
    %386 = vadd.xlane.f32.xlu0 %v366
    %v387 = vpop.xlane.xlu0 %386
    %388 = vadd.xlane.f32.xlu0 %v367
    %v389 = vpop.xlane.xlu0 %388
    %390 = vadd.xlane.f32.xlu0 %v368
    %v391 = vpop.xlane.xlu0 %390
    %392 = vadd.xlane.f32.xlu0 %v369
    %v393 = vpop.xlane.xlu0 %392
    %394 = vadd.xlane.f32.xlu0 %v370
    %v395 = vpop.xlane.xlu0 %394
    %396 = vadd.xlane.f32.xlu0 %v371
    %v397 = vpop.xlane.xlu0 %396
    %398 = vadd.xlane.f32.xlu0 %v372
    %v399 = vpop.xlane.xlu0 %398
    %400 = vadd.xlane.f32.xlu0 %v373
    %v401 = vpop.xlane.xlu0 %400
    %402 = vadd.xlane.f32.xlu0 %v374
    %v403 = vpop.xlane.xlu0 %402
    %404 = vadd.xlane.f32.xlu0 %v375
    %v405 = vpop.xlane.xlu0 %404
    %406 = vadd.xlane.f32.xlu0 %v376
    %v407 = vpop.xlane.xlu0 %406
    %408 = vadd.xlane.f32.xlu0 %v377
    %v409 = vpop.xlane.xlu0 %408
    %v410 = vmul.f32 %v379, 0.015625
    %v411 = vmul.f32 %v381, 0.015625
    %v412 = vmul.f32 %v383, 0.015625
    %v413 = vmul.f32 %v385, 0.015625
    %v414 = vmul.f32 %v387, 0.015625
    %v415 = vmul.f32 %v389, 0.015625
    %v416 = vmul.f32 %v391, 0.015625
    %v417 = vmul.f32 %v393, 0.015625
    %v418 = vmul.f32 %v395, 0.015625
    %v419 = vmul.f32 %v397, 0.015625
    %v420 = vmul.f32 %v399, 0.015625
    %v421 = vmul.f32 %v401, 0.015625
    %v422 = vmul.f32 %v403, 0.015625
    %v423 = vmul.f32 %v405, 0.015625
    %v424 = vmul.f32 %v407, 0.015625
    %v425 = vmul.f32 %v409, 0.015625
    %v426 = vsub.f32 %v279, %v410
    %v427 = vsub.f32 %v283, %v411
    %v428 = vsub.f32 %v289, %v412
    %v429 = vsub.f32 %v293, %v413
    %v430 = vsub.f32 %v299, %v414
    %v431 = vsub.f32 %v303, %v415
    %v432 = vsub.f32 %v309, %v416
    %v433 = vsub.f32 %v313, %v417
    %v434 = vsub.f32 %v319, %v418
    %v435 = vsub.f32 %v323, %v419
    %v436 = vsub.f32 %v329, %v420
    %v437 = vsub.f32 %v333, %v421
    %v438 = vsub.f32 %v339, %v422
    %v439 = vsub.f32 %v343, %v423
    %v440 = vsub.f32 %v349, %v424
    %v441 = vsub.f32 %v353, %v425
    %v442 = vmul.f32 %v426, %v361
    %v443 = vmul.f32 %v427, %v361
    %v444 = vmul.f32 %v428, %v361
    %v445 = vmul.f32 %v429, %v361
    %v446 = vmul.f32 %v430, %v361
    %v447 = vmul.f32 %v431, %v361
    %v448 = vmul.f32 %v432, %v361
    %v449 = vmul.f32 %v433, %v361
    %v450 = vmul.f32 %v434, %v361
    %v451 = vmul.f32 %v435, %v361
    %v452 = vmul.f32 %v436, %v361
    %v453 = vmul.f32 %v437, %v361
    %v454 = vmul.f32 %v438, %v361
    %v455 = vmul.f32 %v439, %v361
    %v456 = vmul.f32 %v440, %v361
    %v457 = vmul.f32 %v441, %v361
    %v458 = vmul.f32 %v442, %v442
    %v459 = vmul.f32 %v443, %v443
    %v460 = vmul.f32 %v444, %v444
    %v461 = vmul.f32 %v445, %v445
    %v462 = vmul.f32 %v446, %v446
    %v463 = vmul.f32 %v447, %v447
    %v464 = vmul.f32 %v448, %v448
    %v465 = vmul.f32 %v449, %v449
    %v466 = vmul.f32 %v450, %v450
    %v467 = vmul.f32 %v451, %v451
    %v468 = vmul.f32 %v452, %v452
    %v469 = vmul.f32 %v453, %v453
    %v470 = vmul.f32 %v454, %v454
    %v471 = vmul.f32 %v455, %v455
    %v472 = vmul.f32 %v456, %v456
    %v473 = vmul.f32 %v457, %v457
    %474 = vadd.xlane.f32.xlu0 %v458
    %v475 = vpop.xlane.xlu0 %474
    %476 = vadd.xlane.f32.xlu0 %v459
    %v477 = vpop.xlane.xlu0 %476
    %478 = vadd.xlane.f32.xlu0 %v460
    %v479 = vpop.xlane.xlu0 %478
    %480 = vadd.xlane.f32.xlu0 %v461
    %v481 = vpop.xlane.xlu0 %480
    %482 = vadd.xlane.f32.xlu0 %v462
    %v483 = vpop.xlane.xlu0 %482
    %484 = vadd.xlane.f32.xlu0 %v463
    %v485 = vpop.xlane.xlu0 %484
    %486 = vadd.xlane.f32.xlu0 %v464
    %v487 = vpop.xlane.xlu0 %486
    %488 = vadd.xlane.f32.xlu0 %v465
    %v489 = vpop.xlane.xlu0 %488
    %490 = vadd.xlane.f32.xlu0 %v466
    %v491 = vpop.xlane.xlu0 %490
    %492 = vadd.xlane.f32.xlu0 %v467
    %v493 = vpop.xlane.xlu0 %492
    %494 = vadd.xlane.f32.xlu0 %v468
    %v495 = vpop.xlane.xlu0 %494
    %496 = vadd.xlane.f32.xlu0 %v469
    %v497 = vpop.xlane.xlu0 %496
    %498 = vadd.xlane.f32.xlu0 %v470
    %v499 = vpop.xlane.xlu0 %498
    %500 = vadd.xlane.f32.xlu0 %v471
    %v501 = vpop.xlane.xlu0 %500
    %502 = vadd.xlane.f32.xlu0 %v472
    %v503 = vpop.xlane.xlu0 %502
    %504 = vadd.xlane.f32.xlu0 %v473
    %v505 = vpop.xlane.xlu0 %504
    %v506 = vmul.f32 %v475, 0.015625
    %v507 = vmul.f32 %v477, 0.015625
    %v508 = vmul.f32 %v479, 0.015625
    %v509 = vmul.f32 %v481, 0.015625
    %v510 = vmul.f32 %v483, 0.015625
    %v511 = vmul.f32 %v485, 0.015625
    %v512 = vmul.f32 %v487, 0.015625
    %v513 = vmul.f32 %v489, 0.015625
    %v514 = vmul.f32 %v491, 0.015625
    %v515 = vmul.f32 %v493, 0.015625
    %v516 = vmul.f32 %v495, 0.015625
    %v517 = vmul.f32 %v497, 0.015625
    %v518 = vmul.f32 %v499, 0.015625
    %v519 = vmul.f32 %v501, 0.015625
    %v520 = vmul.f32 %v503, 0.015625
    %v521 = vmul.f32 %v505, 0.015625
    %v522 = vadd.f32 %v506, 1e-05
    %v523 = vadd.f32 %v507, 1e-05
    %v524 = vadd.f32 %v508, 1e-05
    %v525 = vadd.f32 %v509, 1e-05
    %v526 = vadd.f32 %v510, 1e-05
    %v527 = vadd.f32 %v511, 1e-05
    %v528 = vadd.f32 %v512, 1e-05
    %v529 = vadd.f32 %v513, 1e-05
    %v530 = vadd.f32 %v514, 1e-05
    %v531 = vadd.f32 %v515, 1e-05
    %v532 = vadd.f32 %v516, 1e-05
    %v533 = vadd.f32 %v517, 1e-05
    %v534 = vadd.f32 %v518, 1e-05
    %v535 = vadd.f32 %v519, 1e-05
    %v536 = vadd.f32 %v520, 1e-05
    %v537 = vadd.f32 %v521, 1e-05
    %v538 = vrsqrt.pop %v522
    %v539 = vrsqrt.pop %v523
    %v540 = vrsqrt.pop %v524
    %v541 = vrsqrt.pop %v525
    %v542 = vrsqrt.pop %v526
    %v543 = vrsqrt.pop %v527
    %v544 = vrsqrt.pop %v528
    %v545 = vrsqrt.pop %v529
    %v546 = vrsqrt.pop %v530
    %v547 = vrsqrt.pop %v531
    %v548 = vrsqrt.pop %v532
    %v549 = vrsqrt.pop %v533
    %v550 = vrsqrt.pop %v534
    %v551 = vrsqrt.pop %v535
    %v552 = vrsqrt.pop %v536
    %v553 = vrsqrt.pop %v537
    %v554 = vmul.f32 %v442, %v538
    %v555 = vmul.f32 %v443, %v539
    %v556 = vmul.f32 %v444, %v540
    %v557 = vmul.f32 %v445, %v541
    %v558 = vmul.f32 %v446, %v542
    %v559 = vmul.f32 %v447, %v543
    %v560 = vmul.f32 %v448, %v544
    %v561 = vmul.f32 %v449, %v545
    %v562 = vmul.f32 %v450, %v546
    %v563 = vmul.f32 %v451, %v547
    %v564 = vmul.f32 %v452, %v548
    %v565 = vmul.f32 %v453, %v549
    %v566 = vmul.f32 %v454, %v550
    %v567 = vmul.f32 %v455, %v551
    %v568 = vmul.f32 %v456, %v552
    %v569 = vmul.f32 %v457, %v553
    %v570 = vld [vmem:[%s3] sm:$0x1]
    %v572 = vlaneseq
    %v573 = vshrl.u32 %v572, 7
    %v574 = vsub.s32 0, %v573
    %v575 = vrot.slane %v570, %v574
    %v577 = vmul.f32 %v554, %v575
    %v578 = vmul.f32 %v555, %v575
    %v579 = vmul.f32 %v556, %v575
    %v580 = vmul.f32 %v557, %v575
    %v581 = vmul.f32 %v558, %v575
    %v582 = vmul.f32 %v559, %v575
    %v583 = vmul.f32 %v560, %v575
    %v584 = vmul.f32 %v561, %v575
    %v585 = vmul.f32 %v562, %v575
    %v586 = vmul.f32 %v563, %v575
    %v587 = vmul.f32 %v564, %v575
    %v588 = vmul.f32 %v565, %v575
    %v589 = vmul.f32 %v566, %v575
    %v590 = vmul.f32 %v567, %v575
    %v591 = vmul.f32 %v568, %v575
    %v592 = vmul.f32 %v569, %v575
    %v593 = vld [vmem:[%s4] sm:$0x1]
    %v595 = vlaneseq
    %v596 = vshrl.u32 %v595, 7
    %v597 = vsub.s32 0, %v596
    %v598 = vrot.slane %v593, %v597
    %v600 = vadd.f32 %v577, %v598
    %v601 = vadd.f32 %v578, %v598
    %v602 = vadd.f32 %v579, %v598
    %v603 = vadd.f32 %v580, %v598
    %v604 = vadd.f32 %v581, %v598
    %v605 = vadd.f32 %v582, %v598
    %v606 = vadd.f32 %v583, %v598
    %v607 = vadd.f32 %v584, %v598
    %v608 = vadd.f32 %v585, %v598
    %v609 = vadd.f32 %v586, %v598
    %v610 = vadd.f32 %v587, %v598
    %v611 = vadd.f32 %v588, %v598
    %v612 = vadd.f32 %v589, %v598
    %v613 = vadd.f32 %v590, %v598
    %v614 = vadd.f32 %v591, %v598
    %v615 = vadd.f32 %v592, %v598
    %v616 = vadd.f32 %v600, %v281
    %v617 = vadd.f32 %v601, %v285
    %v618 = vadd.f32 %v602, %v291
    %v619 = vadd.f32 %v603, %v295
    %v620 = vadd.f32 %v604, %v301
    %v621 = vadd.f32 %v605, %v305
    %v622 = vadd.f32 %v606, %v311
    %v623 = vadd.f32 %v607, %v315
    %v624 = vadd.f32 %v608, %v321
    %v625 = vadd.f32 %v609, %v325
    %v626 = vadd.f32 %v610, %v331
    %v627 = vadd.f32 %v611, %v335
    %v628 = vadd.f32 %v612, %v341
    %v629 = vadd.f32 %v613, %v345
    %v630 = vadd.f32 %v614, %v351
    %v631 = vadd.f32 %v615, %v355
    %v632 = vmax.f32 %v616, 0.0
    %v633 = vmax.f32 %v617, 0.0
    %v634 = vmax.f32 %v618, 0.0
    %v635 = vmax.f32 %v619, 0.0
    %v636 = vmax.f32 %v620, 0.0
    %v637 = vmax.f32 %v621, 0.0
    %v638 = vmax.f32 %v622, 0.0
    %v639 = vmax.f32 %v623, 0.0
    %v640 = vmax.f32 %v624, 0.0
    %v641 = vmax.f32 %v625, 0.0
    %v642 = vmax.f32 %v626, 0.0
    %v643 = vmax.f32 %v627, 0.0
    %v644 = vmax.f32 %v628, 0.0
    %v645 = vmax.f32 %v629, 0.0
    %v646 = vmax.f32 %v630, 0.0
    %v647 = vmax.f32 %v631, 0.0
    %648 = vst [vmem:[#allocation9] sm:$0xff] %v632
    %649 = vst [vmem:[#allocation9 + $0x8] sm:$0xff] %v633
    %650 = vst [vmem:[#allocation9 + $0x10] sm:$0xff] %v634
    %651 = vst [vmem:[#allocation9 + $0x18] sm:$0xff] %v635
    %652 = vst [vmem:[#allocation9 + $0x20] sm:$0xff] %v636
    %653 = vst [vmem:[#allocation9 + $0x28] sm:$0xff] %v637
    %654 = vst [vmem:[#allocation9 + $0x30] sm:$0xff] %v638
    %655 = vst [vmem:[#allocation9 + $0x38] sm:$0xff] %v639
    %656 = vst [vmem:[#allocation9 + $0x40] sm:$0xff] %v640
    %657 = vst [vmem:[#allocation9 + $0x48] sm:$0xff] %v641
    %658 = vst [vmem:[#allocation9 + $0x50] sm:$0xff] %v642
    %659 = vst [vmem:[#allocation9 + $0x58] sm:$0xff] %v643
    %660 = vst [vmem:[#allocation9 + $0x60] sm:$0xff] %v644
    %661 = vst [vmem:[#allocation9 + $0x68] sm:$0xff] %v645
    %662 = vst [vmem:[#allocation9 + $0x70] sm:$0xff] %v646
    %663 = vst [vmem:[#allocation9 + $0x78] sm:$0xff] %v647
    %v664 = vpack.c.bf16 %v633, %v632
    %v665 = vpack.c.bf16 %v635, %v634
    %v666 = vpack.c.bf16 %v637, %v636
    %v667 = vpack.c.bf16 %v639, %v638
    %v668 = vpack.c.bf16 %v641, %v640
    %v669 = vpack.c.bf16 %v643, %v642
    %v670 = vpack.c.bf16 %v645, %v644
    %v671 = vpack.c.bf16 %v647, %v646
    %v672 = vld [vmem:[#allocation7] sm:$0xf]
    %v673 = vld [vmem:[#allocation7 + $0x4] sm:$0xf]
    %v674 = vld [vmem:[#allocation7 + $0x8] sm:$0xf]
    %v675 = vld [vmem:[#allocation7 + $0xc] sm:$0xf]
    %v676 = vld [vmem:[#allocation7 + $0x10] sm:$0xf]
    %v677 = vld [vmem:[#allocation7 + $0x14] sm:$0xf]
    %v678 = vld [vmem:[#allocation7 + $0x18] sm:$0xf]
    %v679 = vld [vmem:[#allocation7 + $0x1c] sm:$0xf]
    %v680 = vld [vmem:[#allocation7 + $0x20] sm:$0xf]
    %v681 = vld [vmem:[#allocation7 + $0x24] sm:$0xf]
    %v682 = vld [vmem:[#allocation7 + $0x28] sm:$0xf]
    %v683 = vld [vmem:[#allocation7 + $0x2c] sm:$0xf]
    %v684 = vld [vmem:[#allocation7 + $0x30] sm:$0xf]
    %v685 = vld [vmem:[#allocation7 + $0x34] sm:$0xf]
    %v686 = vld [vmem:[#allocation7 + $0x38] sm:$0xf]
    %v687 = vld [vmem:[#allocation7 + $0x3c] sm:$0xf]
    %v688 = vld [vmem:[%s6] sm:$0x1]
    %v690 = vlaneseq
    %v691 = vshrl.u32 %v690, 7
    %v692 = vsub.s32 0, %v691
    %v693 = vrot.slane %v688, %v692
    %v711 = vunpack.c.l.b16 %v672
    %v712 = vunpack.c.l.b16 %v673
    %v713 = vunpack.c.l.b16 %v674
    %v714 = vunpack.c.l.b16 %v675
    %v715 = vunpack.c.l.b16 %v676
    %v716 = vunpack.c.l.b16 %v677
    %v717 = vunpack.c.l.b16 %v678
    %v718 = vunpack.c.l.b16 %v679
    %v719 = vunpack.c.l.b16 %v680
    %v720 = vunpack.c.l.b16 %v681
    %v721 = vunpack.c.l.b16 %v682
    %v722 = vunpack.c.l.b16 %v683
    %v723 = vunpack.c.l.b16 %v684
    %v724 = vunpack.c.l.b16 %v685
    %v725 = vunpack.c.l.b16 %v686
    %v726 = vunpack.c.l.b16 %v687
    %v727 = vpack.c.b16 %v712, %v711
    %v728 = vpack.c.b16 %v714, %v713
    %v729 = vpack.c.b16 %v716, %v715
    %v730 = vpack.c.b16 %v718, %v717
    %v731 = vpack.c.b16 %v720, %v719
    %v732 = vpack.c.b16 %v722, %v721
    %v733 = vpack.c.b16 %v724, %v723
    %v734 = vpack.c.b16 %v726, %v725
    %743 = vmatprep.subr.bf16.mxu0 0
    %744 = vmatpush1.bf16.msra.mxu0 %v727
    %745 = vmatprep.subr.bf16.mxu0 0
    %746 = vmatpush1.bf16.msra.mxu0 %v728
    %747 = vmatprep.subr.bf16.mxu0 0
    %748 = vmatpush1.bf16.msra.mxu0 %v729
    %749 = vmatprep.subr.bf16.mxu0 0
    %750 = vmatpush1.bf16.msra.mxu0 %v730
    %751 = vmatprep.subr.bf16.mxu0 0
    %752 = vmatpush1.bf16.msra.mxu0 %v731
    %753 = vmatprep.subr.bf16.mxu0 0
    %754 = vmatpush1.bf16.msra.mxu0 %v732
    %755 = vmatprep.subr.bf16.mxu0 0
    %756 = vmatpush1.bf16.msra.mxu0 %v733
    %757 = vmatprep.subr.bf16.mxu0 0
    %758 = vmatpush1.bf16.msra.mxu0 %v734
    %759 = vmatprep.subr.bf16.mxu0 0
    %760 = vmatpush1.bf16.msra.mxu0 0
    %761 = vmatprep.subr.bf16.mxu0 0
    %762 = vmatpush1.bf16.msra.mxu0 0
    %763 = vmatprep.subr.bf16.mxu0 0
    %764 = vmatpush1.bf16.msra.mxu0 0
    %765 = vmatprep.subr.bf16.mxu0 0
    %766 = vmatpush1.bf16.msra.mxu0 0
    %767 = vmatprep.subr.bf16.mxu0 0
    %768 = vmatpush1.bf16.msra.mxu0 0
    %769 = vmatprep.subr.bf16.mxu0 0
    %770 = vmatpush1.bf16.msra.mxu0 0
    %771 = vmatprep.subr.bf16.mxu0 0
    %772 = vmatpush1.bf16.msra.mxu0 0
    %773 = vmatprep.subr.bf16.mxu0 0
    %774 = vmatpush1.bf16.msra.mxu0 0
    %775 = vmatprep.mubr.bf16.mxu0 0
    %776 = vmatmul.mubr.bf16.gmra.mrb[0].mxu0 %v664
    %v777 = vpop.f32.mrb[0].mxu0
    %v778 = vadd.f32 %v693, %v777
    %v779 = vpop.f32.mrb[0].mxu0
    %v780 = vpop.f32.mrb[0].mxu0
    %v781 = vadd.f32 %v693, %v780
    %v782 = vpop.f32.mrb[0].mxu0
    %783 = vmatprep.mubr.bf16.mxu0 0
    %784 = vmatmul.mubr.bf16.gmra.mrb[0].mxu0 %v665
    %v785 = vpop.f32.mrb[0].mxu0
    %v786 = vadd.f32 %v693, %v785
    %v787 = vpop.f32.mrb[0].mxu0
    %v788 = vpop.f32.mrb[0].mxu0
    %v789 = vadd.f32 %v693, %v788
    %v790 = vpop.f32.mrb[0].mxu0
    %791 = vmatprep.mubr.bf16.mxu0 0
    %792 = vmatmul.mubr.bf16.gmra.mrb[0].mxu0 %v666
    %v793 = vpop.f32.mrb[0].mxu0
    %v794 = vadd.f32 %v693, %v793
    %v795 = vpop.f32.mrb[0].mxu0
    %v796 = vpop.f32.mrb[0].mxu0
    %v797 = vadd.f32 %v693, %v796
    %v798 = vpop.f32.mrb[0].mxu0
    %799 = vmatprep.mubr.bf16.mxu0 0
    %800 = vmatmul.mubr.bf16.gmra.mrb[0].mxu0 %v667
    %v801 = vpop.f32.mrb[0].mxu0
    %v802 = vadd.f32 %v693, %v801
    %v803 = vpop.f32.mrb[0].mxu0
    %v804 = vpop.f32.mrb[0].mxu0
    %v805 = vadd.f32 %v693, %v804
    %v806 = vpop.f32.mrb[0].mxu0
    %807 = vmatprep.mubr.bf16.mxu0 0
    %808 = vmatmul.mubr.bf16.gmra.mrb[0].mxu0 %v668
    %v809 = vpop.f32.mrb[0].mxu0
    %v810 = vadd.f32 %v693, %v809
    %v811 = vpop.f32.mrb[0].mxu0
    %v812 = vpop.f32.mrb[0].mxu0
    %v813 = vadd.f32 %v693, %v812
    %v814 = vpop.f32.mrb[0].mxu0
    %815 = vmatprep.mubr.bf16.mxu0 0
    %816 = vmatmul.mubr.bf16.gmra.mrb[0].mxu0 %v669
    %v817 = vpop.f32.mrb[0].mxu0
    %v818 = vadd.f32 %v693, %v817
    %v819 = vpop.f32.mrb[0].mxu0
    %v820 = vpop.f32.mrb[0].mxu0
    %v821 = vadd.f32 %v693, %v820
    %v822 = vpop.f32.mrb[0].mxu0
    %823 = vmatprep.mubr.bf16.mxu0 0
    %824 = vmatmul.mubr.bf16.gmra.mrb[0].mxu0 %v670
    %v825 = vpop.f32.mrb[0].mxu0
    %v826 = vadd.f32 %v693, %v825
    %v827 = vpop.f32.mrb[0].mxu0
    %v828 = vpop.f32.mrb[0].mxu0
    %v829 = vadd.f32 %v693, %v828
    %v830 = vpop.f32.mrb[0].mxu0
    %831 = vmatprep.mubr.bf16.mxu0 0
    %832 = vmatmul.mubr.bf16.gmra.mrb[0].mxu0 %v671
    %v833 = vpop.f32.mrb[0].mxu0
    %v834 = vadd.f32 %v693, %v833
    %v835 = vpop.f32.mrb[0].mxu0
    %v836 = vpop.f32.mrb[0].mxu0
    %v837 = vadd.f32 %v693, %v836
    %v838 = vpop.f32.mrb[0].mxu0
    %839 = vdwg.mxu0
    %840 = vst [vmem:[#allocation8] sm:$0xff] %v778
    %841 = vst [vmem:[#allocation8 + $0x8] sm:$0xff] %v781
    %842 = vst [vmem:[#allocation8 + $0x10] sm:$0xff] %v786
    %843 = vst [vmem:[#allocation8 + $0x18] sm:$0xff] %v789
    %844 = vst [vmem:[#allocation8 + $0x20] sm:$0xff] %v794
    %845 = vst [vmem:[#allocation8 + $0x28] sm:$0xff] %v797
    %846 = vst [vmem:[#allocation8 + $0x30] sm:$0xff] %v802
    %847 = vst [vmem:[#allocation8 + $0x38] sm:$0xff] %v805
    %848 = vst [vmem:[#allocation8 + $0x40] sm:$0xff] %v810
    %849 = vst [vmem:[#allocation8 + $0x48] sm:$0xff] %v813
    %850 = vst [vmem:[#allocation8 + $0x50] sm:$0xff] %v818
    %851 = vst [vmem:[#allocation8 + $0x58] sm:$0xff] %v821
    %852 = vst [vmem:[#allocation8 + $0x60] sm:$0xff] %v826
    %853 = vst [vmem:[#allocation8 + $0x68] sm:$0xff] %v829
    %854 = vst [vmem:[#allocation8 + $0x70] sm:$0xff] %v834
    %855 = vst [vmem:[#allocation8 + $0x78] sm:$0xff] %v837
    // Predicated region
    $region42: #{tpu_custom_call.1} parent=1 // pred_check
      _
    $region43: #{tpu_custom_call.1} parent=1 // pred_check_branch
      %857 = sbr.rel (0) target = $region45
    $region44: #{tpu_custom_call.1} parent=1 // pred_region
      %s859 = ssub.s32 2048, 2048
      %860 = vsyncadd [#allocation4], %s859
      %s861 = sshll.u32 [#allocation8], 4
      %s862 = int_to_ptr.vmem [resolvable:$true] %s861
      %867 = dma.vmem_to_hbm [thread:$0]  %s862, 2048, %s7, [#allocation4], 128, 128, 8
    $region45: #{tpu_custom_call.1} parent=1 // pred_fallthru
      _
    // Predicated region
    $region46: #{tpu_custom_call.1} parent=1 // pred_check
      _
    $region47: #{tpu_custom_call.1} parent=1 // pred_check_branch
      %869 = sbr.rel (0) target = $region49
    $region48: #{tpu_custom_call.1} parent=1 // pred_region
      %s871 = ssub.s32 2048, 2048
      %872 = vsyncadd [#allocation10], %s871
      %s873 = sshll.u32 [#allocation9], 4
      %s874 = int_to_ptr.vmem [resolvable:$true] %s873
      %879 = dma.vmem_to_hbm [thread:$0]  %s874, 2048, %s8, [#allocation10], 128, 128, 8
    $region49: #{tpu_custom_call.1} parent=1 // pred_fallthru
      _
    // Predicated region
    $region50: #{tpu_custom_call.1} parent=1 // pred_check
      _
    $region51: #{tpu_custom_call.1} parent=1 // pred_check_branch
      %881 = sbr.rel (0) target = $region53
    $region52: #{tpu_custom_call.1} parent=1 // pred_region
      %882 = dma.done [#allocation4], 2048
    $region53: #{tpu_custom_call.1} parent=1 // pred_fallthru
      _
    // Predicated region
    $region54: #{tpu_custom_call.1} parent=1 // pred_check
      _
    $region55: #{tpu_custom_call.1} parent=1 // pred_check_branch
      %884 = sbr.rel (0) target = $region57
    $region56: #{tpu_custom_call.1} parent=1 // pred_region
      %885 = dma.done [#allocation10], 2048
    $region57: #{tpu_custom_call.1} parent=1 // pred_fallthru
      _
    %886 = vsyncpa [#allocation3], 1
    %887 = vsyncpa [#allocation6], 1
    %888 = vsyncpa [#allocation4], 1
    %889 = vsyncpa [#allocation10], 1

</llo_original>
